<compile_context>
chip_gen: v5e
topology: v5e:2x2
jax: 0.10.0
libtpu: 0.0.40
codegen_flags: <defaults>
</compile_context>

<pallas_src>
import numpy as np
import jax
import jax.numpy as jnp
from jax.experimental import pallas as pl
from jax.experimental.pallas import tpu as pltpu


def _make_bayesian_hints_weight(hints_len: int, sid_bins: int) -> np.ndarray:
    """Replicates the deterministic weight init of BayesianHints.__init__.

    Returns the conv weight with the kernel_size=1 dims squeezed:
        W[o, c]  with shape (2*sid_bins, hints_len)
    """
    # The PyTorch code loops i over range(hints_len) while indexing the first
    # (sid_bins) axis of A — reproduced verbatim; it implicitly requires
    # sid_bins >= hints_len, so make that explicit.
    assert sid_bins >= hints_len, "BayesianHints init requires sid_bins >= hints_len"
    A = np.zeros((sid_bins, hints_len), dtype=np.float32)
    for i in range(hints_len):
        A[i, i:] = 1.0
    B = 1.0 - A
    W = np.zeros((2 * sid_bins, hints_len), dtype=np.float32)
    W[1::2, :] = A   # odd output channels  <- A
    W[::2, :] = B    # even output channels <- B
    return W


def _conv1x1_nchw_kernel(w_ref, x_ref, o_ref):
    # w_ref: (Cout, Cin), x_ref: (Cin, TM), o_ref: (Cout, TM)  -- lane-dense TM.
    o_ref[...] = jnp.dot(
        w_ref[...], x_ref[...], preferred_element_type=jnp.float32
    ).astype(o_ref.dtype)


def _pick_tm(HW: int, tm_cap: int = 32768) -> int:
    """Pick the spatial tile size.

    Rules (per perf review):
      * tile is a multiple of 128 (unmasked lane-dense stores), capped at tm_cap;
      * at least 2 tiles whenever HW >= 256 (pipeline overlap + megacore);
      * among admissible tiles, prefer one dividing HW exactly (no ragged tail),
        else one whose remainder is >= half a tile;
      * HW < 256 falls back to a single full-extent block (layout-legal).
    """
    if HW < 256:
        return HW
    half = -(-HW // 2)                              # ceil(HW / 2) -> guarantees >= 2 tiles
    upper = min(tm_cap, ((half + 127) // 128) * 128)
    upper = max(128, upper)
    # 1) largest 128-multiple that divides HW exactly (no ragged block).
    for tm in range(upper, 127, -128):
        if HW % tm == 0:
            return tm
    # 2) largest one whose ragged tail is at least half a tile.
    for tm in range(upper, 127, -128):
        if HW % tm >= tm // 2:
            return tm
    # 3) fall back to the largest admissible tile.
    return upper


def bayesian_hints_forward(x_nchw: jax.Array, w_oc: jax.Array, *, tm_cap: int = 32768) -> jax.Array:
    """x_nchw: (N, hints_len, H, W) float32; w_oc: (2*sid_bins, hints_len).

    Returns (N, 2*sid_bins, H, W) float32, identical to the PyTorch forward.
    """
    N, Cin, H, W = x_nchw.shape
    Cout = w_oc.shape[0]
    HW = H * W

    # Free reshape: NCHW -> (N, Cin, H*W); no transposes anywhere.
    x_flat = x_nchw.reshape(N, Cin, HW)

    tm = _pick_tm(HW, tm_cap)
    grid = (N, pl.cdiv(HW, tm))

    cost = pl.CostEstimate(
        flops=2 * N * HW * Cin * Cout,
        transcendentals=0,
        bytes_accessed=4 * (N * HW * Cin + N * HW * Cout + Cout * Cin),
    )

    out_flat = pl.pallas_call(
        _conv1x1_nchw_kernel,
        out_shape=jax.ShapeDtypeStruct((N, Cout, HW), jnp.float32),
        grid_spec=pltpu.PrefetchScalarGridSpec(
            num_scalar_prefetch=0,
            grid=grid,
            in_specs=[
                # Weight: constant block index -> stays resident in VMEM (no per-step DMA).
                pl.BlockSpec((Cout, Cin), lambda n, s: (0, 0)),
                # Activations: batch dim squeezed, (Cin, tm) tile per grid step.
                pl.BlockSpec((None, Cin, tm), lambda n, s: (n, 0, s)),
            ],
            out_specs=pl.BlockSpec((None, Cout, tm), lambda n, s: (n, 0, s)),
        ),
        compiler_params=pltpu.CompilerParams(
            dimension_semantics=("parallel", "parallel"),
        ),
        cost_estimate=cost,
    )(w_oc, x_flat)

    # Free reshape back: (N, Cout, H*W) -> NCHW.
    return out_flat.reshape(N, Cout, H, W)


if __name__ == "__main__":
    hints_len = 8
    sid_bins = 8
    N, H, W = 2, 16, 16

    key = jax.random.PRNGKey(0)
    x = jax.random.normal(key, (N, hints_len, H, W), dtype=jnp.float32)

    w = jnp.asarray(_make_bayesian_hints_weight(hints_len, sid_bins))  # (2*sid_bins, hints_len)

    y = bayesian_hints_forward(x, w)
    y = jax.block_until_ready(y)

    # Reference check against plain-JAX 1x1 conv (sum over input channels).
    y_ref = jnp.einsum("nchw,oc->nohw", x, w)
    np.testing.assert_allclose(np.asarray(y), np.asarray(y_ref), rtol=1e-5, atol=1e-5)
    assert y.shape == (N, 2 * sid_bins, H, W)

    print("KERNEL_OK")
</pallas_src>

<mosaic_0001>
module attributes {stable_mosaic.version = 11 : i64} {
  func.func @_conv1x1_nchw_kernel(%arg0: i32, %arg1: i32, %arg2: memref<16x8xf32, #tpu.memory_space<vmem>>, %arg3: memref<1x8x128xf32, #tpu.memory_space<vmem>>, %arg4: memref<1x16x128xf32, #tpu.memory_space<vmem>>) attributes {dimension_semantics = [#tpu.dimension_semantics<parallel>, #tpu.dimension_semantics<parallel>], iteration_bounds = array<i64: 2, 2>, scalar_prefetch = 0 : i64, scratch_operands = 0 : i64, tpu.core_type = #tpu.core_type<tc>, window_params = [{pipeline_mode = #tpu.pipeline_mode<synchronous>, transform_indices = @transform_0, window_bounds = array<i64: 16, 8>}, {transform_indices = @transform_1, window_bounds = array<i64: 1, 8, 128>}, {transform_indices = @transform_2, window_bounds = array<i64: 1, 16, 128>}]} {
    %c0 = arith.constant 0 : index
    %c0_0 = arith.constant 0 : index
    %0 = vector.load %arg2[%c0, %c0_0] : memref<16x8xf32, #tpu.memory_space<vmem>>, vector<16x8xf32>
    %c0_1 = arith.constant 0 : index
    %c0_2 = arith.constant 0 : index
    %c0_3 = arith.constant 0 : index
    %1 = vector.load %arg3[%c0_1, %c0_2, %c0_3] : memref<1x8x128xf32, #tpu.memory_space<vmem>>, vector<1x8x128xf32>
    %2 = vector.shape_cast %1 : vector<1x8x128xf32> to vector<8x128xf32>
    %cst = arith.constant dense<0.000000e+00> : vector<16x128xf32>
    %3 = tpu.matmul %0, %2, %cst {dimension_numbers = #tpu.dot_dimension_numbers<[1], [0], [0], [1], [0, 0, 1, 1], [], []>} : vector<16x8xf32>, vector<8x128xf32>, vector<16x128xf32> -> vector<16x128xf32>
    %c0_4 = arith.constant 0 : index
    %c0_5 = arith.constant 0 : index
    %c0_6 = arith.constant 0 : index
    %4 = vector.load %arg4[%c0_4, %c0_5, %c0_6] : memref<1x16x128xf32, #tpu.memory_space<vmem>>, vector<1x16x128xf32>
    %5 = vector.shape_cast %4 : vector<1x16x128xf32> to vector<16x128xf32>
    %6 = vector.shape_cast %3 : vector<16x128xf32> to vector<1x16x128xf32>
    tpu.vector_store %arg4[%c0_4, %c0_5, %c0_6], %6 {strides = array<i32>} : memref<1x16x128xf32, #tpu.memory_space<vmem>>, vector<1x16x128xf32>,
    return
  }
  func.func @transform_0(%arg0: i32, %arg1: i32) -> (i32, i32) {
    %c0_i32 = arith.constant 0 : i32
    %c0_i32_0 = arith.constant 0 : i32
    %c0_i32_1 = arith.constant 0 : i32
    return %c0_i32, %c0_i32_0 : i32, i32
  }
  func.func @transform_1(%arg0: i32, %arg1: i32) -> (i32, i32, i32) {
    %c0_i32 = arith.constant 0 : i32
    %c0_i32_0 = arith.constant 0 : i32
    return %arg0, %c0_i32, %arg1 : i32, i32, i32
  }
  func.func @transform_2(%arg0: i32, %arg1: i32) -> (i32, i32, i32) {
    %c0_i32 = arith.constant 0 : i32
    %c0_i32_0 = arith.constant 0 : i32
    return %arg0, %c0_i32, %arg1 : i32, i32, i32
  }
}

</mosaic_0001>

<llo_original>
// kernel: tpu_custom_call.1
$region0: #{tpu_custom_call.1}
  #allocation0 [shape = 'u32[]', space=smem, size = 0x4, offset = 0x4, fixed_abs, tag = 'smem constant byte address 0x4 - core index']
  #allocation1 [shape = 'u32[72,128]{1,0:T(1,128)}', space=vmem, size = 0x9000, scoped, tag = 'internal scratch']
  %s0 = inlined_call_operand.vmem [shape: f32[16,8], index: 0, kind: input, shape index: {}]
  %s1 = inlined_call_operand.hbm [shape: f32[2,8,256], index: 1, kind: input, shape index: {}]
  %s2 = inlined_call_operand.hbm [shape: f32[2,16,256], index: 2, kind: output, shape index: {}]
  %s3 = sld [smem:[#allocation0]]
  $region45: #{tpu_custom_call.1} parent=0
    _
  %s5 = ssub.s32 1, %s3
  %s6 = scalar_select 0, %s5, %s3
  $region1: #{tpu_custom_call.1} parent=0
    #allocation2 [shape = 'u8[8192]{0}', space=vmem, size = 0x2000, scoped, tag = 'input window, operand 1']
    #allocation3 [shape = 's32[2]{0}', space=sflag, size = 0x8, scoped, tag = 'scoped memory for tpu_custom_call.1']
    #allocation4 [shape = 's32[2]{0}', space=sflag, size = 0x8, scoped, tag = 'scoped memory for tpu_custom_call.1']
    #allocation5 [shape = 'u8[16384]{0}', space=vmem, size = 0x4000, scoped, tag = 'output window, operand 0']
    %7 = vsyncpa [#allocation3], 0
    %s8 = scalar_lea.sflag [#allocation3], 1
    %9 = vsyncpa %s8, 0
    %10 = vsyncpa [#allocation4], 0
    %s11 = scalar_lea.sflag [#allocation4], 1
    %12 = vsyncpa %s11, 0
    loop: start=0, step=1, limit=6
    $region2: #{tpu_custom_call.1} parent=1 // loop_pre_header
      _
    $region3: #{tpu_custom_call.1} parent=1 // loop_header
      %s14 = sphi 0, %s18
      %p15 = scmp.ge.s32.totalorder %s14, 6
      %s21 = sphi 0, %s33
      %s22 = sphi 0, %s29
      %s23 = sphi 0, %s21
      %s24 = sphi 0, %s22
      %s25 = sphi 0, %s23
      %s26 = sphi 0, %s24
      %s34 = sphi 0, %s34
      %s36 = sphi 0, %s34
      %s37 = sphi 0, %s36
      %s51 = sphi 0, %s37
      %s59 = sphi 0, %s61
      %s62 = sphi 0, %s59
      %s63 = sphi 0, %s62
      %s79 = sphi 0, %s63
      %s87 = sphi 0, %s89
      %s90 = sphi 0, %s87
      %s91 = sphi 0, %s90
      %s107 = sphi 0, %s91
    $region4: #{tpu_custom_call.1} parent=1 // loop_header_branch
      %17 = sbr.rel (%p15) target = $region8
    $region5: #{tpu_custom_call.1} parent=1 // loop_body
      %s19 = ssub.s32 %s14, 1
      %s20 = ssub.s32 %s14, 2
      %s27 = sadd.s32 1, %s22
      %p28 = scmp.ge.s32.totalorder %s27, 2
      %s29 = scalar_select %p28, 0, %s27
      %s30 = sadd.s32 1, %s21
      %s31 = scalar_select %p28, %s30, %s21
      %p32 = scmp.ge.s32.totalorder %s31, 2
      %s33 = scalar_select %p32, 0, %s31
      %s35 = sadd.s32 %s34, 1
      %p38 = scmp.eq.s32.totalorder %s14, 3
      %p39 = scmp.ne.s32.totalorder %s34, %s36
      %p40 = scmp.eq.s32.totalorder %s14, 0
      %p41 = por %p39, %p40
      %p42 = scmp.ne.s32.totalorder %s34, %s36
      %p43 = scmp.eq.s32.totalorder %s19, 3
      %p44 = por %p42, %p43
      %p45 = scmp.ne.s32.totalorder %s36, %s37
      %p46 = scmp.eq.s32.totalorder %s19, 0
      %p47 = por %p45, %p46
      %p48 = scmp.ne.s32.totalorder %s36, %s37
      %p49 = scmp.eq.s32.totalorder %s20, 3
      %p50 = por %p48, %p49
      %p52 = scmp.ne.s32.totalorder %s37, %s51
      %p53 = scmp.eq.s32.totalorder %s20, 0
      %p54 = por %p52, %p53
      %s55 = ssub.s32 %s21, %s33
      %s56 = ssub.s32 %s22, %s29
      %s57 = sor.u32 %s55, %s56
      %p58 = scmp.eq.s32.totalorder %s57, 0
      %s60 = sadd.s32 %s59, 1
      %s61 = scalar_select %p58, %s59, %s60
      %p64 = pneg %p58
      %p65 = scmp.eq.s32.totalorder %s14, 3
      %p66 = por %p64, %p65
      %p67 = scmp.ne.s32.totalorder %s59, %s62
      %p68 = scmp.eq.s32.totalorder %s14, 0
      %p69 = por %p67, %p68
      %p70 = scmp.ne.s32.totalorder %s59, %s62
      %p71 = scmp.eq.s32.totalorder %s19, 3
      %p72 = por %p70, %p71
      %p73 = scmp.ne.s32.totalorder %s62, %s63
      %p74 = scmp.eq.s32.totalorder %s19, 0
      %p75 = por %p73, %p74
      %p76 = scmp.ne.s32.totalorder %s62, %s63
      %p77 = scmp.eq.s32.totalorder %s20, 3
      %p78 = por %p76, %p77
      %p80 = scmp.ne.s32.totalorder %s63, %s79
      %p81 = scmp.eq.s32.totalorder %s20, 0
      %p82 = por %p80, %p81
      %s83 = ssub.s32 %s21, %s33
      %s84 = ssub.s32 %s22, %s29
      %s85 = sor.u32 %s83, %s84
      %p86 = scmp.eq.s32.totalorder %s85, 0
      %s88 = sadd.s32 %s87, 1
      %s89 = scalar_select %p86, %s87, %s88
      %p92 = pneg %p86
      %p93 = scmp.eq.s32.totalorder %s14, 3
      %p94 = por %p92, %p93
      %p95 = scmp.ne.s32.totalorder %s87, %s90
      %p96 = scmp.eq.s32.totalorder %s14, 0
      %p97 = por %p95, %p96
      %p98 = scmp.ne.s32.totalorder %s87, %s90
      %p99 = scmp.eq.s32.totalorder %s19, 3
      %p100 = por %p98, %p99
      %p101 = scmp.ne.s32.totalorder %s90, %s91
      %p102 = scmp.eq.s32.totalorder %s19, 0
      %p103 = por %p101, %p102
      %p104 = scmp.ne.s32.totalorder %s90, %s91
      %p105 = scmp.eq.s32.totalorder %s20, 3
      %p106 = por %p104, %p105
      %p108 = scmp.ne.s32.totalorder %s91, %s107
      %p109 = scmp.eq.s32.totalorder %s20, 0
      %p110 = por %p108, %p109
      %p111 = scmp.le.s32.totalorder 1, %s14
      %p112 = scmp.lt.s32.totalorder %s14, 5
      %p113 = pnand %p111, %p112
      %p114 = pneg %p113
      // Predicated region
      $region9: #{tpu_custom_call.1} parent=5 // pred_check
        _
      $region10: #{tpu_custom_call.1} parent=5 // pred_check_branch
        %116 = sbr.rel (%p113) target = $region12
      $region11: #{tpu_custom_call.1} parent=5 // pred_region
        %s117 = ssub.s32 %s14, 1
        // Predicated region
        $region13: #{tpu_custom_call.1} parent=11 // pred_check
          %p118 = pneg %p47
        $region14: #{tpu_custom_call.1} parent=11 // pred_check_branch
          %120 = sbr.rel (%p118) target = $region16
        $region15: #{tpu_custom_call.1} parent=11 // pred_region
          _
        $region16: #{tpu_custom_call.1} parent=11 // pred_fallthru
          _
      $region12: #{tpu_custom_call.1} parent=5 // pred_fallthru
        _
      %p121 = scmp.lt.s32.totalorder %s14, 4
      // Predicated region
      $region17: #{tpu_custom_call.1} parent=5 // pred_check
        %p122 = pneg %p121
      $region18: #{tpu_custom_call.1} parent=5 // pred_check_branch
        %124 = sbr.rel (%p122) target = $region20
      $region19: #{tpu_custom_call.1} parent=5 // pred_region
        // Predicated region
        $region21: #{tpu_custom_call.1} parent=19 // pred_check
          %p125 = pneg %p69
        $region22: #{tpu_custom_call.1} parent=19 // pred_check_branch
          %127 = sbr.rel (%p125) target = $region24
        $region23: #{tpu_custom_call.1} parent=19 // pred_region
          %s128 = sand.u32 %s59, 1
          %s129 = scalar_lea.sflag [#allocation3], %s128
          %s130 = sand.u32 %s59, 1
          %s131 = smul.addr %s130, 8
          %s132 = scalar_lea.vmem [#allocation2], %s131
          %134 = vsyncadd %s129, 0
          %s135 = smul.addr %s21, 2
          %s136 = sadd.s32 %s22, %s135
          %s137 = smul.addr %s136, 8
          %s138 = scalar_lea.hbm %s1, %s137
          %s140 = sshll.u32 %s138, 4
          %s141 = int_to_ptr.hbm [resolvable:$true] %s140
          %s142 = sshll.u32 %s132, 4
          %s143 = int_to_ptr.vmem [resolvable:$true] %s142
          %145 = dma.hbm_to_vmem [thread:$0]  %s141, 128, %s143, %s129
        $region24: #{tpu_custom_call.1} parent=19 // pred_fallthru
          _
      $region20: #{tpu_custom_call.1} parent=5 // pred_fallthru
        _
      %p146 = scmp.le.s32.totalorder 1, %s14
      %p147 = scmp.lt.s32.totalorder %s14, 5
      %p148 = pnand %p146, %p147
      %p149 = pneg %p148
      // Predicated region
      $region25: #{tpu_custom_call.1} parent=5 // pred_check
        _
      $region26: #{tpu_custom_call.1} parent=5 // pred_check_branch
        %151 = sbr.rel (%p148) target = $region28
      $region27: #{tpu_custom_call.1} parent=5 // pred_region
        %s152 = ssub.s32 %s14, 1
        %s153 = sand.u32 %s62, 1
        %s154 = scalar_lea.sflag [#allocation3], %s153
        %s155 = sand.u32 %s62, 1
        %s156 = smul.addr %s155, 8
        %s157 = scalar_lea.vmem [#allocation2], %s156
        // Predicated region
        $region29: #{tpu_custom_call.1} parent=27 // pred_check
          %p158 = pneg %p75
        $region30: #{tpu_custom_call.1} parent=27 // pred_check_branch
          %160 = sbr.rel (%p158) target = $region32
        $region31: #{tpu_custom_call.1} parent=27 // pred_region
          %162 = dma.done %s154, 128
        $region32: #{tpu_custom_call.1} parent=27 // pred_fallthru
          _
        %p163 = pneg %p47
        %p164 = pneg %p44
        %s165 = sand.u32 %s62, 1
        %s166 = scalar_lea.sflag [#allocation3], %s165
        %s167 = sand.u32 %s62, 1
        %s168 = smul.addr %s167, 8
        %s169 = scalar_lea.vmem [#allocation2], %s168
        %p170 = pneg %p75
        %p171 = pneg %p72
        %p172 = pneg %p103
        %p173 = pneg %p100
        %s174 = sand.u32 %s90, 1
        %s175 = scalar_lea.sflag [#allocation4], %s174
        %s176 = sand.u32 %s90, 1
        %s177 = smul.addr %s176, 16
        %s178 = scalar_lea.vmem [#allocation5], %s177
        %v179 = vld [vmem:[%s0] sm:$0xff]
        %v180 = vld [vmem:[%s0 + $0x8] sm:$0xff]
        %v181 = vld [vmem:[%s157] sm:$0xff]
        %vm182 = vcmask 64512
        %v184 = vsel %vm182, %v179, 0
        %v187 = vsel %vm182, %v180, 0
        %189 = vmatpush.msra.mxu0 0.0
        %190 = vmatpush.msra.mxu0 0.0
        %191 = vmatpush.msra.mxu0 0.0
        %192 = vmatpush.msra.mxu0 0.0
        %193 = vmatpush.msra.mxu0 0.0
        %194 = vmatpush.msra.mxu0 0.0
        %195 = vmatpush.msra.mxu0 0.0
        %196 = vmatpush.msra.mxu0 0.0
        %197 = vmatpush.msra.mxu0 0.0
        %198 = vmatpush.msra.mxu0 0.0
        %199 = vmatpush.msra.mxu0 0.0
        %200 = vmatpush.msra.mxu0 0.0
        %201 = vmatpush.msra.mxu0 0.0
        %202 = vmatpush.msra.mxu0 0.0
        %203 = vmatpush.msra.mxu0 0.0
        %204 = vmatpush.msra.mxu0 %v181
        %205 = vmatmul.f32.gmra.mxu0 %v184
        %v206 = vpop.f32.mrf.mxu0
        %v207 = vadd.f32 0.0, %v206
        %208 = vmatmul.f32.gmra.mxu0 %v187
        %v209 = vpop.f32.mrf.mxu0
        %v210 = vadd.f32 0.0, %v209
        %211 = vdwg.mxu0
        %212 = vst [vmem:[%s178] sm:$0xff] %v207
        %213 = vst [vmem:[%s178 + $0x8] sm:$0xff] %v210
        %s214 = sand.u32 %s90, 1
        %s215 = scalar_lea.sflag [#allocation4], %s214
        %s216 = sand.u32 %s90, 1
        %s217 = smul.addr %s216, 16
        %s218 = scalar_lea.vmem [#allocation5], %s217
        // Predicated region
        $region33: #{tpu_custom_call.1} parent=27 // pred_check
          %p219 = pneg %p100
        $region34: #{tpu_custom_call.1} parent=27 // pred_check_branch
          %221 = sbr.rel (%p219) target = $region36
        $region35: #{tpu_custom_call.1} parent=27 // pred_region
          %223 = vsyncadd %s215, 0
          %s224 = smul.addr %s23, 4
          %s225 = sadd.s32 %s24, %s224
          %s226 = smul.addr %s225, 8
          %s227 = scalar_lea.hbm %s2, %s226
          %s228 = sshll.u32 %s218, 4
          %s229 = int_to_ptr.vmem [resolvable:$true] %s228
          %s230 = sshll.u32 %s227, 4
          %s231 = int_to_ptr.hbm [resolvable:$true] %s230
          %236 = dma.vmem_to_hbm [thread:$0]  %s229, 256, %s231, %s215, 128, 256, 8
        $region36: #{tpu_custom_call.1} parent=27 // pred_fallthru
          _
      $region28: #{tpu_custom_call.1} parent=5 // pred_fallthru
        _
      %p237 = scmp.le.s32.totalorder 2, %s14
      // Predicated region
      $region37: #{tpu_custom_call.1} parent=5 // pred_check
        %p238 = pneg %p237
      $region38: #{tpu_custom_call.1} parent=5 // pred_check_branch
        %240 = sbr.rel (%p238) target = $region40
      $region39: #{tpu_custom_call.1} parent=5 // pred_region
        %s241 = ssub.s32 %s14, 2
        // Predicated region
        $region41: #{tpu_custom_call.1} parent=39 // pred_check
          %p242 = pneg %p106
        $region42: #{tpu_custom_call.1} parent=39 // pred_check_branch
          %244 = sbr.rel (%p242) target = $region44
        $region43: #{tpu_custom_call.1} parent=39 // pred_region
          %s245 = sand.u32 %s91, 1
          %s246 = scalar_lea.sflag [#allocation4], %s245
          %s247 = sand.u32 %s91, 1
          %s248 = smul.addr %s247, 16
          %s249 = scalar_lea.vmem [#allocation5], %s248
          %251 = dma.done %s246, 256
        $region44: #{tpu_custom_call.1} parent=39 // pred_fallthru
          _
      $region40: #{tpu_custom_call.1} parent=5 // pred_fallthru
        _
    $region6: #{tpu_custom_call.1} parent=1 // loop_footer
      %s18 = sadd.s32 1, %s14
    $region7: #{tpu_custom_call.1} parent=1 // loop_footer_branch
      %13 = sbr.rel target = $region3
    $region8: #{tpu_custom_call.1} parent=1 // loop_exit
      _
    %252 = vsyncpa [#allocation3], 1
    %s253 = scalar_lea.sflag [#allocation3], 1
    %254 = vsyncpa %s253, 1
    %255 = vsyncpa [#allocation4], 1
    %s256 = scalar_lea.sflag [#allocation4], 1
    %257 = vsyncpa %s256, 1

</llo_original>
